<compile_context>
chip_gen: v7x
topology: tpu7x:2x2x1
jax: 0.10.0
libtpu: 0.0.40
codegen_flags: <defaults>
</compile_context>

<pallas_src>
import functools
import math

import jax
import jax.numpy as jnp
from jax.experimental import pallas as pl
from jax.experimental.pallas import tpu as pltpu


def _round_up(v, m):
    return -(-v // m) * m


def _akgnn_kernel(a_ref, x_ref, o_ref, acc_ref, *, tile_k, rs_col):
    # a_ref  : (TM, TK) bf16 tile of the dense weighted adjacency (streamed)
    # x_ref  : (Ncols, Fp) bf16 node features, VMEM-resident (index map is constant)
    # o_ref  : (TM, Fp) f32 output tile (written on the last K step)
    # acc_ref: (TM, Fp) f32 matmul accumulator (VMEM scratch); column rs_col = rowsum
    k = pl.program_id(1)

    @pl.when(k == 0)
    def _init():
        acc_ref[...] = jnp.zeros_like(acc_ref)

    row0 = pl.multiple_of(k * tile_k, 128)
    xk = x_ref[pl.ds(row0, tile_k), :]                      # slice resident x, no HBM re-read
    # bf16 x bf16 -> f32 accumulate on the MXU (no VALU upcast of A).
    acc_ref[...] += jnp.dot(a_ref[...], xk, preferred_element_type=jnp.float32)

    @pl.when(k == pl.num_programs(1) - 1)
    def _finalize():
        # Rowsum was folded into the matmul via the ones column at rs_col.
        # NOTE: padded rows have rowsum 0 -> inf/NaN there; they are sliced off by
        # the wrapper (matches the PyTorch divide-by-zero behavior for real rows).
        inv = pl.reciprocal(acc_ref[:, rs_col:rs_col + 1], approx=True)  # EUP slot
        o_ref[...] = (acc_ref[...] * inv).astype(o_ref.dtype)


def akgnn_conv(x, edge_index, lambda_param, *, tile_m=512, tile_k=512):
    """x: [N, F] float32, edge_index: [2, E] int32, lambda_param: scalar."""
    N, F = x.shape
    lam = 1.0 + jax.nn.relu(lambda_param)
    w_self = (2.0 * lam - 2.0) / lam
    w_edge = 2.0 / lam

    # ---- tiling / padding (lane-dense output; rows/cols padded independently) ----
    f_pad = _round_up(F + 1, 128)                 # +1 guarantees a spare "ones" column
    tile_m = max(16, min(tile_m, _round_up(N, 16)))   # bf16 sublane pack = 16
    tile_k = max(128, min(tile_k, _round_up(N, 128)))
    n_rows = _round_up(N, tile_m)
    n_cols = _round_up(N, tile_k)

    # ---- glue: densify the sparse COO matrix directly into the streaming dtype ----
    # Duplicate edges accumulate exactly in int32; single cast to bf16.
    diag = jnp.arange(N)
    counts = jnp.zeros((n_rows, n_cols), dtype=jnp.int32)
    counts = counts.at[edge_index[0], edge_index[1]].add(1)
    a = (counts.astype(jnp.float32) * w_edge).astype(jnp.bfloat16)
    a = a.at[diag, diag].add(w_self.astype(jnp.bfloat16))

    # x padded, with the ones column at index F (folds A @ ones into the matmul);
    # padded A columns are zero, so setting the whole column to 1 is safe.
    x_pad = jnp.zeros((n_cols, f_pad), dtype=x.dtype)
    x_pad = x_pad.at[:N, :F].set(x)
    x_pad = x_pad.at[:, F].set(1.0)
    x_pad = x_pad.astype(jnp.bfloat16)

    grid = (n_rows // tile_m, n_cols // tile_k)

    # Explicit VMEM budget: double-buffered A tiles + resident x (conservatively x2)
    # + double-buffered output tile + f32 accumulator scratch. Capped at 48 MiB to
    # leave headroom inside v7x's 64 MiB per-TensorCore VMEM.
    vmem_need = (2 * tile_m * tile_k * 2          # A tiles, bf16
                 + 2 * n_cols * f_pad * 2         # resident x, bf16
                 + 2 * tile_m * f_pad * 4         # output tiles, f32
                 + tile_m * f_pad * 4)            # accumulator scratch
    vmem_limit = int(min(48 * 1024 * 1024,
                         max(16 * 1024 * 1024, 2 * vmem_need)))

    cost = pl.CostEstimate(
        flops=2 * n_rows * n_cols * f_pad,
        transcendentals=n_rows,
        bytes_accessed=(n_rows * n_cols * 2       # A (bf16), read once
                        + n_cols * f_pad * 2      # x (bf16), read once (resident)
                        + n_rows * f_pad * 4),    # output (f32)
    )

    kernel = functools.partial(_akgnn_kernel, tile_k=tile_k, rs_col=F)

    out = pl.pallas_call(
        kernel,
        out_shape=jax.ShapeDtypeStruct((n_rows, f_pad), x.dtype),
        grid_spec=pltpu.PrefetchScalarGridSpec(
            num_scalar_prefetch=0,
            grid=grid,
            in_specs=[
                pl.BlockSpec((tile_m, tile_k), lambda i, k: (i, k)),   # A tile (streamed)
                pl.BlockSpec((n_cols, f_pad), lambda i, k: (0, 0)),    # x resident in VMEM
            ],
            out_specs=pl.BlockSpec((tile_m, f_pad), lambda i, k: (i, 0)),
            scratch_shapes=[
                pltpu.VMEM((tile_m, f_pad), jnp.float32),              # matmul accumulator
            ],
        ),
        compiler_params=pltpu.CompilerParams(
            dimension_semantics=("parallel", "arbitrary"),
            vmem_limit_bytes=vmem_limit,
        ),
        cost_estimate=cost,
    )(a, x_pad)

    return out[:N, :F]


def akgnn_ref(x, edge_index, lambda_param):
    """Pure-JAX reference mirroring the PyTorch forward."""
    N, F = x.shape
    lam = 1.0 + jax.nn.relu(lambda_param)
    a = jnp.zeros((N, N), dtype=jnp.float32)
    diag = jnp.arange(N)
    a = a.at[diag, diag].add((2.0 * lam - 2.0) / lam)
    a = a.at[edge_index[0], edge_index[1]].add(2.0 / lam)
    e_rowsum = a @ jnp.ones((N, 1), dtype=jnp.float32)
    return (a @ x) / e_rowsum


if __name__ == "__main__":
    key = jax.random.PRNGKey(0)
    k_x, k_e = jax.random.split(key)

    N, F, E = 16, 8, 32
    x = jax.random.normal(k_x, (N, F), dtype=jnp.float32)
    edge_index = jax.random.randint(k_e, (2, E), 0, N, dtype=jnp.int32)
    lambda_param = jnp.float32(1.0)  # matches nn.Parameter(torch.tensor(1.0))

    out = akgnn_conv(x, edge_index, lambda_param)
    out = jax.block_until_ready(out)

    ref = akgnn_ref(x, edge_index, lambda_param)
    assert out.shape == (N, F)
    # bf16 A/x stream + approx reciprocal -> relaxed tolerance vs the f32 reference.
    assert jnp.allclose(out, ref, atol=2e-2, rtol=2e-2), "mismatch vs reference"

    print("KERNEL_OK")
</pallas_src>

<mosaic_0001>
module attributes {stable_mosaic.version = 11 : i64} {
  func.func @_akgnn_kernel(%arg0: i32, %arg1: i32, %arg2: memref<16x128xbf16, #tpu.memory_space<vmem>>, %arg3: memref<128x128xbf16, #tpu.memory_space<vmem>>, %arg4: memref<16x128xf32, #tpu.memory_space<vmem>>, %arg5: memref<16x128xf32, #tpu.memory_space<vmem>>) attributes {dimension_semantics = [#tpu.dimension_semantics<parallel>, #tpu.dimension_semantics<arbitrary>], iteration_bounds = array<i64: 1, 1>, scalar_prefetch = 0 : i64, scratch_operands = 1 : i64, tpu.core_type = #tpu.core_type<tc>, window_params = [{transform_indices = @transform_0, window_bounds = array<i64: 16, 128>}, {pipeline_mode = #tpu.pipeline_mode<synchronous>, transform_indices = @transform_1, window_bounds = array<i64: 128, 128>}, {transform_indices = @transform_2, window_bounds = array<i64: 16, 128>}]} {
    %c0_i32 = arith.constant 0 : i32
    %0 = arith.cmpi eq, %arg1, %c0_i32 : i32
    %1 = arith.extui %0 : i1 to i32
    %c0_i32_0 = arith.constant 0 : i32
    %2 = arith.cmpi ne, %1, %c0_i32_0 : i32
    scf.if %2 {
      %cst_9 = arith.constant 0.000000e+00 : f32
      %15 = vector.broadcast %cst_9 : f32 to vector<16x128xf32>
      %c0_10 = arith.constant 0 : index
      %c0_11 = arith.constant 0 : index
      %16 = vector.load %arg5[%c0_10, %c0_11] : memref<16x128xf32, #tpu.memory_space<vmem>>, vector<16x128xf32>
      tpu.vector_store %arg5[%c0_10, %c0_11], %15 {strides = array<i32>} : memref<16x128xf32, #tpu.memory_space<vmem>>, vector<16x128xf32>,
    } else {
    }
    %c128_i32 = arith.constant 128 : i32
    %3 = arith.muli %arg1, %c128_i32 : i32
    %4 = tpu.assume_multiple %3, 128 : i32
    %5 = arith.index_cast %4 : i32 to index
    %c0 = arith.constant 0 : index
    %6 = vector.load %arg3[%5, %c0] : memref<128x128xbf16, #tpu.memory_space<vmem>>, vector<128x128xbf16>
    %c0_1 = arith.constant 0 : index
    %c0_2 = arith.constant 0 : index
    %7 = vector.load %arg5[%c0_1, %c0_2] : memref<16x128xf32, #tpu.memory_space<vmem>>, vector<16x128xf32>
    %c0_3 = arith.constant 0 : index
    %c0_4 = arith.constant 0 : index
    %8 = vector.load %arg2[%c0_3, %c0_4] : memref<16x128xbf16, #tpu.memory_space<vmem>>, vector<16x128xbf16>
    %cst = arith.constant dense<0.000000e+00> : vector<16x128xf32>
    %9 = tpu.matmul %8, %6, %cst {dimension_numbers = #tpu.dot_dimension_numbers<[1], [0], [0], [1], [0, 0, 1, 1], [], []>} : vector<16x128xbf16>, vector<128x128xbf16>, vector<16x128xf32> -> vector<16x128xf32>
    %10 = arith.addf %7, %9 : vector<16x128xf32>
    %c0_5 = arith.constant 0 : index
    %c0_6 = arith.constant 0 : index
    %11 = vector.load %arg5[%c0_5, %c0_6] : memref<16x128xf32, #tpu.memory_space<vmem>>, vector<16x128xf32>
    tpu.vector_store %arg5[%c0_5, %c0_6], %10 {strides = array<i32>} : memref<16x128xf32, #tpu.memory_space<vmem>>, vector<16x128xf32>,
    %c0_i32_7 = arith.constant 0 : i32
    %12 = arith.cmpi eq, %arg1, %c0_i32_7 : i32
    %13 = arith.extui %12 : i1 to i32
    %c0_i32_8 = arith.constant 0 : i32
    %14 = arith.cmpi ne, %13, %c0_i32_8 : i32
    scf.if %14 {
      %c0_9 = arith.constant 0 : index
      %c8 = arith.constant 8 : index
      %15 = vector.load %arg5[%c0_9, %c8] : memref<16x128xf32, #tpu.memory_space<vmem>>, vector<16x1xf32>
      %16 = tpu.reciprocal %15 {approx = true} : vector<16x1xf32> -> vector<16x1xf32>
      %c0_10 = arith.constant 0 : index
      %c0_11 = arith.constant 0 : index
      %17 = vector.load %arg5[%c0_10, %c0_11] : memref<16x128xf32, #tpu.memory_space<vmem>>, vector<16x128xf32>
      %18 = vector.broadcast %16 : vector<16x1xf32> to vector<16x128xf32>
      %19 = arith.mulf %17, %18 : vector<16x128xf32>
      %c0_12 = arith.constant 0 : index
      %c0_13 = arith.constant 0 : index
      %20 = vector.load %arg4[%c0_12, %c0_13] : memref<16x128xf32, #tpu.memory_space<vmem>>, vector<16x128xf32>
      tpu.vector_store %arg4[%c0_12, %c0_13], %19 {strides = array<i32>} : memref<16x128xf32, #tpu.memory_space<vmem>>, vector<16x128xf32>,
    } else {
    }
    return
  }
  func.func @transform_0(%arg0: i32, %arg1: i32) -> (i32, i32) {
    %c0_i32 = arith.constant 0 : i32
    return %arg0, %arg1 : i32, i32
  }
  func.func @transform_1(%arg0: i32, %arg1: i32) -> (i32, i32) {
    %c0_i32 = arith.constant 0 : i32
    %c0_i32_0 = arith.constant 0 : i32
    %c0_i32_1 = arith.constant 0 : i32
    return %c0_i32, %c0_i32_0 : i32, i32
  }
  func.func @transform_2(%arg0: i32, %arg1: i32) -> (i32, i32) {
    %c0_i32 = arith.constant 0 : i32
    %c0_i32_0 = arith.constant 0 : i32
    return %arg0, %c0_i32 : i32, i32
  }
}

</mosaic_0001>

<llo_original>
// kernel: tpu_custom_call.1
$region0: #{tpu_custom_call.1}
  #allocation0 [shape = 'u32[]', space=smem, size = 0x4, offset = 0x4, fixed_abs, tag = 'smem constant byte address 0x4 - core index']
  #allocation1 [shape = 'u32[144,128]{1,0:T(1,128)}', space=vmem, size = 0x12000, scoped, tag = 'internal scratch']
  #allocation2 [shape = 'f32[16,128]{1,0:T(8,128)}', space=vmem, size = 0x2000, scoped, tag = 'scratch operand']
  %s0 = inlined_call_operand.hbm [shape: bf16[16,128], index: 0, kind: input, shape index: {}]
  %s1 = inlined_call_operand.hbm [shape: bf16[128,128], index: 1, kind: input, shape index: {}]
  %s2 = inlined_call_operand.hbm [shape: f32[16,128], index: 2, kind: output, shape index: {}]
  %s3 = sld [smem:[#allocation0]]
  $region34: #{tpu_custom_call.1} parent=0
    _
  %s5 = ssub.s32 1, %s3
  %s6 = scalar_select 0, %s5, %s3
  $region1: #{tpu_custom_call.1} parent=0
    #allocation3 [shape = 'u8[4096]{0}', space=vmem, size = 0x1000, scoped, tag = 'input window, operand 0, single buffered']
    #allocation4 [shape = 's32[1]{0}', space=sflag, size = 0x4, scoped, tag = 'scoped memory for tpu_custom_call.1']
    #allocation5 [shape = 's32[1]{0}', space=sflag, size = 0x4, scoped, tag = 'scoped memory for tpu_custom_call.1']
    #allocation6 [shape = 'u8[32768]{0}', space=vmem, size = 0x8000, scoped, tag = 'input window, operand 1, single buffered']
    #allocation7 [shape = 's32[1]{0}', space=sflag, size = 0x4, scoped, tag = 'scoped memory for tpu_custom_call.1']
    #allocation8 [shape = 'u8[8192]{0}', space=vmem, size = 0x2000, scoped, tag = 'output window, operand 0, single buffered']
    %7 = vsyncpa [#allocation4], 0
    %8 = vsyncpa [#allocation7], 0
    %9 = vsyncpa [#allocation5], 0
    // Predicated region
    $region2: #{tpu_custom_call.1} parent=1 // pred_check
      _
    $region3: #{tpu_custom_call.1} parent=1 // pred_check_branch
      %11 = sbr.rel (0) target = $region5
    $region4: #{tpu_custom_call.1} parent=1 // pred_region
      %s13 = ssub.s32 128, 128
      %14 = vsyncadd [#allocation4], %s13
      %s15 = sshll.u32 [#allocation3], 4
      %s16 = int_to_ptr.vmem [resolvable:$true] %s15
      %21 = dma.hbm_to_vmem [thread:$0]  %s0, 128, %s16, [#allocation4], 64, 64, 4
    $region5: #{tpu_custom_call.1} parent=1 // pred_fallthru
      _
    // Predicated region
    $region6: #{tpu_custom_call.1} parent=1 // pred_check
      _
    $region7: #{tpu_custom_call.1} parent=1 // pred_check_branch
      %23 = sbr.rel (0) target = $region9
    $region8: #{tpu_custom_call.1} parent=1 // pred_region
      %s25 = ssub.s32 1024, 1024
      %26 = vsyncadd [#allocation7], %s25
      %s27 = sshll.u32 [#allocation6], 4
      %s28 = int_to_ptr.vmem [resolvable:$true] %s27
      %33 = dma.hbm_to_vmem [thread:$0]  %s1, 1024, %s28, [#allocation7], 64, 64, 4
    $region9: #{tpu_custom_call.1} parent=1 // pred_fallthru
      _
    // Predicated region
    $region10: #{tpu_custom_call.1} parent=1 // pred_check
      _
    $region11: #{tpu_custom_call.1} parent=1 // pred_check_branch
      %35 = sbr.rel (0) target = $region13
    $region12: #{tpu_custom_call.1} parent=1 // pred_region
      %36 = dma.done [#allocation4], 128
    $region13: #{tpu_custom_call.1} parent=1 // pred_fallthru
      _
    // Predicated region
    $region14: #{tpu_custom_call.1} parent=1 // pred_check
      _
    $region15: #{tpu_custom_call.1} parent=1 // pred_check_branch
      %38 = sbr.rel (0) target = $region17
    $region16: #{tpu_custom_call.1} parent=1 // pred_region
      %39 = dma.done [#allocation7], 1024
    $region17: #{tpu_custom_call.1} parent=1 // pred_fallthru
      _
    %p41 = scmp.eq.s32.totalorder 0, 0
    // Predicated region
    $region18: #{tpu_custom_call.1} parent=1 // pred_check
      %p42 = pneg %p41
    $region19: #{tpu_custom_call.1} parent=1 // pred_check_branch
      %44 = sbr.rel (%p42) target = $region21
    $region20: #{tpu_custom_call.1} parent=1 // pred_region
      %45 = vst [vmem:[#allocation2] sm:$0xff] 0.0
      %46 = vst [vmem:[#allocation2 + $0x8] sm:$0xff] 0.0
    $region21: #{tpu_custom_call.1} parent=1 // pred_fallthru
      _
    %s47 = smul.u32 0, 128
    %s48 = sshra.s32 %s47, 3
    %s49 = sand.u32 %s47, 7
    %s50 = smul.addr %s48, 4
    %s51 = scalar_lea.vmem [#allocation6], %s50
    %v52 = vld [vmem:[%s51] sm:$0xf]
    %v53 = vld [vmem:[%s51 + $0x4] sm:$0xf]
    %v54 = vld [vmem:[%s51 + $0x8] sm:$0xf]
    %v55 = vld [vmem:[%s51 + $0xc] sm:$0xf]
    %v56 = vld [vmem:[%s51 + $0x10] sm:$0xf]
    %v57 = vld [vmem:[%s51 + $0x14] sm:$0xf]
    %v58 = vld [vmem:[%s51 + $0x18] sm:$0xf]
    %v59 = vld [vmem:[%s51 + $0x1c] sm:$0xf]
    %v60 = vld [vmem:[%s51 + $0x20] sm:$0xf]
    %v61 = vld [vmem:[%s51 + $0x24] sm:$0xf]
    %v62 = vld [vmem:[%s51 + $0x28] sm:$0xf]
    %v63 = vld [vmem:[%s51 + $0x2c] sm:$0xf]
    %v64 = vld [vmem:[%s51 + $0x30] sm:$0xf]
    %v65 = vld [vmem:[%s51 + $0x34] sm:$0xf]
    %v66 = vld [vmem:[%s51 + $0x38] sm:$0xf]
    %v67 = vld [vmem:[%s51 + $0x3c] sm:$0xf]
    %v68 = vld [vmem:[#allocation2] sm:$0xff]
    %v69 = vld [vmem:[#allocation2 + $0x8] sm:$0xff]
    %v70 = vld [vmem:[#allocation3] sm:$0xf]
    %v71 = vld [vmem:[#allocation3 + $0x4] sm:$0xf]
    %v74 = vunpack.c.l.b16 %v70
    %v75 = vunpack.c.l.b16 %v71
    %v76 = vpack.c.b16 %v75, %v74
    %v94 = vunpack.c.l.b16 %v52
    %v95 = vunpack.c.l.b16 %v53
    %v96 = vunpack.c.l.b16 %v54
    %v97 = vunpack.c.l.b16 %v55
    %v98 = vunpack.c.l.b16 %v56
    %v99 = vunpack.c.l.b16 %v57
    %v100 = vunpack.c.l.b16 %v58
    %v101 = vunpack.c.l.b16 %v59
    %v102 = vunpack.c.l.b16 %v60
    %v103 = vunpack.c.l.b16 %v61
    %v104 = vunpack.c.l.b16 %v62
    %v105 = vunpack.c.l.b16 %v63
    %v106 = vunpack.c.l.b16 %v64
    %v107 = vunpack.c.l.b16 %v65
    %v108 = vunpack.c.l.b16 %v66
    %v109 = vunpack.c.l.b16 %v67
    %v110 = vpack.c.b16 %v95, %v94
    %v111 = vpack.c.b16 %v97, %v96
    %v112 = vpack.c.b16 %v99, %v98
    %v113 = vpack.c.b16 %v101, %v100
    %v114 = vpack.c.b16 %v103, %v102
    %v115 = vpack.c.b16 %v105, %v104
    %v116 = vpack.c.b16 %v107, %v106
    %v117 = vpack.c.b16 %v109, %v108
    %126 = vmatprep.subr.bf16.mxu0 0
    %127 = vmatpush1.bf16.msra.mxu0 %v110
    %128 = vmatprep.subr.bf16.mxu0 0
    %129 = vmatpush1.bf16.msra.mxu0 %v111
    %130 = vmatprep.subr.bf16.mxu0 0
    %131 = vmatpush1.bf16.msra.mxu0 %v112
    %132 = vmatprep.subr.bf16.mxu0 0
    %133 = vmatpush1.bf16.msra.mxu0 %v113
    %134 = vmatprep.subr.bf16.mxu0 0
    %135 = vmatpush1.bf16.msra.mxu0 %v114
    %136 = vmatprep.subr.bf16.mxu0 0
    %137 = vmatpush1.bf16.msra.mxu0 %v115
    %138 = vmatprep.subr.bf16.mxu0 0
    %139 = vmatpush1.bf16.msra.mxu0 %v116
    %140 = vmatprep.subr.bf16.mxu0 0
    %141 = vmatpush1.bf16.msra.mxu0 %v117
    %142 = vmatprep.subr.bf16.mxu0 0
    %143 = vmatpush1.bf16.msra.mxu0 0
    %144 = vmatprep.subr.bf16.mxu0 0
    %145 = vmatpush1.bf16.msra.mxu0 0
    %146 = vmatprep.subr.bf16.mxu0 0
    %147 = vmatpush1.bf16.msra.mxu0 0
    %148 = vmatprep.subr.bf16.mxu0 0
    %149 = vmatpush1.bf16.msra.mxu0 0
    %150 = vmatprep.subr.bf16.mxu0 0
    %151 = vmatpush1.bf16.msra.mxu0 0
    %152 = vmatprep.subr.bf16.mxu0 0
    %153 = vmatpush1.bf16.msra.mxu0 0
    %154 = vmatprep.subr.bf16.mxu0 0
    %155 = vmatpush1.bf16.msra.mxu0 0
    %156 = vmatprep.subr.bf16.mxu0 0
    %157 = vmatpush1.bf16.msra.mxu0 0
    %158 = vmatprep.mubr.bf16.mxu0 0
    %159 = vmatmul.mubr.bf16.gmra.mrb[0].mxu0 %v76
    %v160 = vpop.f32.mrb[0].mxu0
    %v161 = vadd.f32 0.0, %v160
    %v162 = vpop.f32.mrb[0].mxu0
    %v163 = vpop.f32.mrb[0].mxu0
    %v164 = vadd.f32 0.0, %v163
    %v165 = vpop.f32.mrb[0].mxu0
    %166 = vdwg.mxu0
    %v167 = vadd.f32 %v68, %v161
    %v168 = vadd.f32 %v69, %v164
    %169 = vst [vmem:[#allocation2] sm:$0xff] %v167
    %170 = vst [vmem:[#allocation2 + $0x8] sm:$0xff] %v168
    // Predicated region
    $region22: #{tpu_custom_call.1} parent=1 // pred_check
      %p171 = pneg %p41
    $region23: #{tpu_custom_call.1} parent=1 // pred_check_branch
      %173 = sbr.rel (%p171) target = $region25
    $region24: #{tpu_custom_call.1} parent=1 // pred_region
      %v174 = vld [vmem:[#allocation2] sm:$0xff]
      %v175 = vld [vmem:[#allocation2 + $0x8] sm:$0xff]
      %v176 = vrcp.pop %v174
      %v177 = vrcp.pop %v175
      %179 = vset.pattern.permute.xlu0 8
      %180 = vperm.xlu0 %179, %v176
      %v181 = vpop.permute.xlu0 %180
      %184 = vset.pattern.permute.xlu0 8
      %185 = vperm.xlu0 %184, %v177
      %v186 = vpop.permute.xlu0 %185
      %v188 = vmul.f32 %v174, %v181
      %v189 = vmul.f32 %v175, %v186
      %190 = vst [vmem:[#allocation8] sm:$0xff] %v188
      %191 = vst [vmem:[#allocation8 + $0x8] sm:$0xff] %v189
    $region25: #{tpu_custom_call.1} parent=1 // pred_fallthru
      _
    // Predicated region
    $region26: #{tpu_custom_call.1} parent=1 // pred_check
      _
    $region27: #{tpu_custom_call.1} parent=1 // pred_check_branch
      %193 = sbr.rel (0) target = $region29
    $region28: #{tpu_custom_call.1} parent=1 // pred_region
      %s195 = ssub.s32 256, 256
      %196 = vsyncadd [#allocation5], %s195
      %s197 = sshll.u32 [#allocation8], 4
      %s198 = int_to_ptr.vmem [resolvable:$true] %s197
      %203 = dma.vmem_to_hbm [thread:$0]  %s198, 256, %s2, [#allocation5], 128, 128, 8
    $region29: #{tpu_custom_call.1} parent=1 // pred_fallthru
      _
    // Predicated region
    $region30: #{tpu_custom_call.1} parent=1 // pred_check
      _
    $region31: #{tpu_custom_call.1} parent=1 // pred_check_branch
      %205 = sbr.rel (0) target = $region33
    $region32: #{tpu_custom_call.1} parent=1 // pred_region
      %206 = dma.done [#allocation5], 256
    $region33: #{tpu_custom_call.1} parent=1 // pred_fallthru
      _
    %207 = vsyncpa [#allocation4], 1
    %208 = vsyncpa [#allocation7], 1
    %209 = vsyncpa [#allocation5], 1

</llo_original>
